<compile_context>
chip_gen: v7x
topology: tpu7x:2x2x1
jax: 0.10.0
libtpu: 0.0.40
codegen_flags: <defaults>
</compile_context>

<pallas_src>
import functools

import jax
import jax.numpy as jnp
from jax import lax
from jax.experimental import pallas as pl
from jax.experimental.pallas import tpu as pltpu


def _dsc_kernel(x_ref, w_ref, o_ref, stack_ref, *, C, KH, KW, Wp, T):
    # One grid step == one batch element.
    #   x_ref:     (C, X_Wb)      zero-padded, spatially flattened input slab
    #   w_ref:     (O, KH*KW*C)   fused (pointwise x depthwise) weights, tap-major
    #   o_ref:     (O, T)         lane-dense output slab (T multiple of 128)
    #   stack_ref: (KH*KW*C, T)   VMEM scratch: shifted im2col tap stack
    #
    # Build the tap stack once per tile (KH*KW static lane shifts through the
    # XLU), then issue a single deep matmul with K = KH*KW*C so the MXU sees
    # one contraction instead of KH*KW nearly-empty K=C pushes.
    for kh in range(KH):
        for kw in range(KW):
            tap = kh * KW + kw
            s = kh * Wp + kw                              # static flat tap shift
            stack_ref[tap * C:(tap + 1) * C, :] = x_ref[:, s:s + T]
    o_ref[...] = jnp.dot(
        w_ref[...].astype(jnp.float32),
        stack_ref[...],
        preferred_element_type=jnp.float32,
    ).astype(o_ref.dtype)


def depthwise_separable_conv(x, w_depthwise, w_pointwise, padding):
    """x: (N, C, H, W); w_depthwise: (C, KH, KW); w_pointwise: (O, C)."""
    N, C, H, W = x.shape
    O = w_pointwise.shape[0]
    KH, KW = w_depthwise.shape[1], w_depthwise.shape[2]

    Hp, Wp = H + 2 * padding, W + 2 * padding
    Ho, Wo = Hp - KH + 1, Wp - KW + 1
    Lp = Hp * Wp                                  # flat padded length per batch
    s_max = (KH - 1) * Wp + (KW - 1)              # largest tap shift
    T = pl.cdiv(Lp, 128) * 128                    # lane-dense output width
    X_Wb = pl.cdiv(T + s_max, 128) * 128          # 128-aligned input width

    # Layout prep (tiny XLA ops): keep (N, C, ...) order so there is no
    # cross-batch transpose/relayout pass; the (Hp, Wp) -> Lp flatten is a
    # contiguous reshape.  Tail columns are zero so shifted reads stay benign.
    x_pad = jnp.pad(x, ((0, 0), (0, 0), (padding, padding), (padding, padding)))
    x_flat = x_pad.reshape(N, C, Lp)
    x_flat = jnp.pad(x_flat, ((0, 0), (0, 0), (0, X_Wb - Lp)))

    # Fused weight, hoisted out of the hot loop:
    #   w_fused[o, tap*C + c] = w_pointwise[o, c] * w_depthwise[c, kh, kw]
    wd_t = jnp.transpose(w_depthwise.reshape(C, KH * KW))           # (KH*KW, C)
    w_fused = (w_pointwise[:, None, :] * wd_t[None, :, :]).reshape(O, KH * KW * C)

    kernel = functools.partial(_dsc_kernel, C=C, KH=KH, KW=KW, Wp=Wp, T=T)

    itemsize = jnp.dtype(x.dtype).itemsize
    flops = 2 * N * O * (KH * KW * C) * T
    bytes_accessed = (N * C * X_Wb + N * O * T + O * KH * KW * C) * itemsize

    # Per-step VMEM budget: double-buffered input/output blocks + im2col
    # scratch + weights, with headroom for compiler-internal copies.  Stays
    # far under the v7x 64 MiB physical / 32 MiB scoped ceiling.
    vmem_bytes = itemsize * (2 * C * X_Wb + 2 * O * T
                             + KH * KW * C * T + 2 * O * KH * KW * C)
    vmem_limit = max(int(vmem_bytes) + (1 << 20), 8 << 20)

    out_flat = pl.pallas_call(
        kernel,
        out_shape=jax.ShapeDtypeStruct((N, O, T), x.dtype),
        grid=(N,),
        in_specs=[
            pl.BlockSpec((None, C, X_Wb), lambda n: (n, 0, 0)),
            pl.BlockSpec((O, KH * KW * C), lambda n: (0, 0)),
        ],
        out_specs=pl.BlockSpec((None, O, T), lambda n: (n, 0, 0)),
        scratch_shapes=[pltpu.VMEM((KH * KW * C, T), jnp.float32)],
        compiler_params=pltpu.CompilerParams(
            dimension_semantics=("parallel",),
            vmem_limit_bytes=vmem_limit),
        cost_estimate=pl.CostEstimate(flops=flops, transcendentals=0,
                                      bytes_accessed=bytes_accessed),
    )(x_flat, w_fused)

    # Drop lane padding and the invalid (h >= Ho or w >= Wo) columns; output is
    # already (N, O, ...) ordered, so no final transpose pass is needed.
    out = out_flat[:, :, :Lp].reshape(N, O, Hp, Wp)[:, :, :Ho, :Wo]
    return out


def _reference(x, w_depthwise, w_pointwise, padding):
    C = x.shape[1]
    dw = lax.conv_general_dilated(
        x, w_depthwise[:, None, :, :], window_strides=(1, 1),
        padding=((padding, padding), (padding, padding)),
        dimension_numbers=("NCHW", "OIHW", "NCHW"),
        feature_group_count=C)
    out = lax.conv_general_dilated(
        dw, w_pointwise[:, :, None, None], window_strides=(1, 1),
        padding="VALID", dimension_numbers=("NCHW", "OIHW", "NCHW"))
    return out


if __name__ == "__main__":
    # Module config: nin=4, nout=8, kernel_size=3, padding=1, bias=False
    N, C_IN, C_OUT, H, W, K, PAD = 2, 4, 8, 16, 16, 3, 1

    key = jax.random.PRNGKey(0)
    kx, kd, kp = jax.random.split(key, 3)
    x = jax.random.normal(kx, (N, C_IN, H, W), dtype=jnp.float32)
    # PyTorch depthwise weight is (nin, 1, k, k) -> squeeze group dim;
    # pointwise weight (nout, nin, 1, 1) -> (nout, nin).
    w_dw = jax.random.normal(kd, (C_IN, K, K), dtype=jnp.float32) * 0.1
    w_pw = jax.random.normal(kp, (C_OUT, C_IN), dtype=jnp.float32) * 0.1

    out = depthwise_separable_conv(x, w_dw, w_pw, PAD)
    out = jax.block_until_ready(out)

    ref = _reference(x, w_dw, w_pw, PAD)
    assert out.shape == (N, C_OUT, H, W), out.shape
    assert jnp.allclose(out, ref, atol=1e-3, rtol=1e-3), "mismatch vs reference"

    print("KERNEL_OK")
</pallas_src>

<mosaic_0001>
module attributes {stable_mosaic.version = 11 : i64} {
  func.func @_dsc_kernel(%arg0: i32, %arg1: memref<1x4x512xf32, #tpu.memory_space<vmem>>, %arg2: memref<8x36xf32, #tpu.memory_space<vmem>>, %arg3: memref<1x8x384xf32, #tpu.memory_space<vmem>>, %arg4: memref<36x384xf32, #tpu.memory_space<vmem>>) attributes {dimension_semantics = [#tpu.dimension_semantics<parallel>], iteration_bounds = array<i64: 2>, scalar_prefetch = 0 : i64, scratch_operands = 1 : i64, tpu.core_type = #tpu.core_type<tc>, window_params = [{transform_indices = @transform_0, window_bounds = array<i64: 1, 4, 512>}, {pipeline_mode = #tpu.pipeline_mode<synchronous>, transform_indices = @transform_1, window_bounds = array<i64: 8, 36>}, {transform_indices = @transform_2, window_bounds = array<i64: 1, 8, 384>}]} {
    %c0 = arith.constant 0 : index
    %c0_0 = arith.constant 0 : index
    %c0_1 = arith.constant 0 : index
    %0 = vector.load %arg1[%c0, %c0_0, %c0_1] : memref<1x4x512xf32, #tpu.memory_space<vmem>>, vector<1x4x384xf32>
    %1 = vector.shape_cast %0 : vector<1x4x384xf32> to vector<4x384xf32>
    %c0_2 = arith.constant 0 : index
    %c0_3 = arith.constant 0 : index
    %2 = vector.load %arg4[%c0_2, %c0_3] : memref<36x384xf32, #tpu.memory_space<vmem>>, vector<4x384xf32>
    tpu.vector_store %arg4[%c0_2, %c0_3], %1 {strides = array<i32>} : memref<36x384xf32, #tpu.memory_space<vmem>>, vector<4x384xf32>,
    %c0_4 = arith.constant 0 : index
    %c0_5 = arith.constant 0 : index
    %c1 = arith.constant 1 : index
    %3 = vector.load %arg1[%c0_4, %c0_5, %c1] : memref<1x4x512xf32, #tpu.memory_space<vmem>>, vector<1x4x384xf32>
    %4 = vector.shape_cast %3 : vector<1x4x384xf32> to vector<4x384xf32>
    %c4 = arith.constant 4 : index
    %c0_6 = arith.constant 0 : index
    %5 = vector.load %arg4[%c4, %c0_6] : memref<36x384xf32, #tpu.memory_space<vmem>>, vector<4x384xf32>
    tpu.vector_store %arg4[%c4, %c0_6], %4 {strides = array<i32>} : memref<36x384xf32, #tpu.memory_space<vmem>>, vector<4x384xf32>,
    %c0_7 = arith.constant 0 : index
    %c0_8 = arith.constant 0 : index
    %c2 = arith.constant 2 : index
    %6 = vector.load %arg1[%c0_7, %c0_8, %c2] : memref<1x4x512xf32, #tpu.memory_space<vmem>>, vector<1x4x384xf32>
    %7 = vector.shape_cast %6 : vector<1x4x384xf32> to vector<4x384xf32>
    %c8 = arith.constant 8 : index
    %c0_9 = arith.constant 0 : index
    %8 = vector.load %arg4[%c8, %c0_9] : memref<36x384xf32, #tpu.memory_space<vmem>>, vector<4x384xf32>
    tpu.vector_store %arg4[%c8, %c0_9], %7 {strides = array<i32>} : memref<36x384xf32, #tpu.memory_space<vmem>>, vector<4x384xf32>,
    %c0_10 = arith.constant 0 : index
    %c0_11 = arith.constant 0 : index
    %c18 = arith.constant 18 : index
    %9 = vector.load %arg1[%c0_10, %c0_11, %c18] : memref<1x4x512xf32, #tpu.memory_space<vmem>>, vector<1x4x384xf32>
    %10 = vector.shape_cast %9 : vector<1x4x384xf32> to vector<4x384xf32>
    %c12 = arith.constant 12 : index
    %c0_12 = arith.constant 0 : index
    %11 = vector.load %arg4[%c12, %c0_12] : memref<36x384xf32, #tpu.memory_space<vmem>>, vector<4x384xf32>
    tpu.vector_store %arg4[%c12, %c0_12], %10 {strides = array<i32>} : memref<36x384xf32, #tpu.memory_space<vmem>>, vector<4x384xf32>,
    %c0_13 = arith.constant 0 : index
    %c0_14 = arith.constant 0 : index
    %c19 = arith.constant 19 : index
    %12 = vector.load %arg1[%c0_13, %c0_14, %c19] : memref<1x4x512xf32, #tpu.memory_space<vmem>>, vector<1x4x384xf32>
    %13 = vector.shape_cast %12 : vector<1x4x384xf32> to vector<4x384xf32>
    %c16 = arith.constant 16 : index
    %c0_15 = arith.constant 0 : index
    %14 = vector.load %arg4[%c16, %c0_15] : memref<36x384xf32, #tpu.memory_space<vmem>>, vector<4x384xf32>
    tpu.vector_store %arg4[%c16, %c0_15], %13 {strides = array<i32>} : memref<36x384xf32, #tpu.memory_space<vmem>>, vector<4x384xf32>,
    %c0_16 = arith.constant 0 : index
    %c0_17 = arith.constant 0 : index
    %c20 = arith.constant 20 : index
    %15 = vector.load %arg1[%c0_16, %c0_17, %c20] : memref<1x4x512xf32, #tpu.memory_space<vmem>>, vector<1x4x384xf32>
    %16 = vector.shape_cast %15 : vector<1x4x384xf32> to vector<4x384xf32>
    %c20_18 = arith.constant 20 : index
    %c0_19 = arith.constant 0 : index
    %17 = vector.load %arg4[%c20_18, %c0_19] : memref<36x384xf32, #tpu.memory_space<vmem>>, vector<4x384xf32>
    tpu.vector_store %arg4[%c20_18, %c0_19], %16 {strides = array<i32>} : memref<36x384xf32, #tpu.memory_space<vmem>>, vector<4x384xf32>,
    %c0_20 = arith.constant 0 : index
    %c0_21 = arith.constant 0 : index
    %c36 = arith.constant 36 : index
    %18 = vector.load %arg1[%c0_20, %c0_21, %c36] : memref<1x4x512xf32, #tpu.memory_space<vmem>>, vector<1x4x384xf32>
    %19 = vector.shape_cast %18 : vector<1x4x384xf32> to vector<4x384xf32>
    %c24 = arith.constant 24 : index
    %c0_22 = arith.constant 0 : index
    %20 = vector.load %arg4[%c24, %c0_22] : memref<36x384xf32, #tpu.memory_space<vmem>>, vector<4x384xf32>
    tpu.vector_store %arg4[%c24, %c0_22], %19 {strides = array<i32>} : memref<36x384xf32, #tpu.memory_space<vmem>>, vector<4x384xf32>,
    %c0_23 = arith.constant 0 : index
    %c0_24 = arith.constant 0 : index
    %c37 = arith.constant 37 : index
    %21 = vector.load %arg1[%c0_23, %c0_24, %c37] : memref<1x4x512xf32, #tpu.memory_space<vmem>>, vector<1x4x384xf32>
    %22 = vector.shape_cast %21 : vector<1x4x384xf32> to vector<4x384xf32>
    %c28 = arith.constant 28 : index
    %c0_25 = arith.constant 0 : index
    %23 = vector.load %arg4[%c28, %c0_25] : memref<36x384xf32, #tpu.memory_space<vmem>>, vector<4x384xf32>
    tpu.vector_store %arg4[%c28, %c0_25], %22 {strides = array<i32>} : memref<36x384xf32, #tpu.memory_space<vmem>>, vector<4x384xf32>,
    %c0_26 = arith.constant 0 : index
    %c0_27 = arith.constant 0 : index
    %c38 = arith.constant 38 : index
    %24 = vector.load %arg1[%c0_26, %c0_27, %c38] : memref<1x4x512xf32, #tpu.memory_space<vmem>>, vector<1x4x384xf32>
    %25 = vector.shape_cast %24 : vector<1x4x384xf32> to vector<4x384xf32>
    %c32 = arith.constant 32 : index
    %c0_28 = arith.constant 0 : index
    %26 = vector.load %arg4[%c32, %c0_28] : memref<36x384xf32, #tpu.memory_space<vmem>>, vector<4x384xf32>
    tpu.vector_store %arg4[%c32, %c0_28], %25 {strides = array<i32>} : memref<36x384xf32, #tpu.memory_space<vmem>>, vector<4x384xf32>,
    %c0_29 = arith.constant 0 : index
    %c0_30 = arith.constant 0 : index
    %27 = vector.load %arg2[%c0_29, %c0_30] : memref<8x36xf32, #tpu.memory_space<vmem>>, vector<8x36xf32>
    %c0_31 = arith.constant 0 : index
    %c0_32 = arith.constant 0 : index
    %28 = vector.load %arg4[%c0_31, %c0_32] : memref<36x384xf32, #tpu.memory_space<vmem>>, vector<36x384xf32>
    %cst = arith.constant dense<0.000000e+00> : vector<8x384xf32>
    %29 = tpu.matmul %27, %28, %cst {dimension_numbers = #tpu.dot_dimension_numbers<[1], [0], [0], [1], [0, 0, 1, 1], [], []>} : vector<8x36xf32>, vector<36x384xf32>, vector<8x384xf32> -> vector<8x384xf32>
    %c0_33 = arith.constant 0 : index
    %c0_34 = arith.constant 0 : index
    %c0_35 = arith.constant 0 : index
    %30 = vector.load %arg3[%c0_33, %c0_34, %c0_35] : memref<1x8x384xf32, #tpu.memory_space<vmem>>, vector<1x8x384xf32>
    %31 = vector.shape_cast %30 : vector<1x8x384xf32> to vector<8x384xf32>
    %32 = vector.shape_cast %29 : vector<8x384xf32> to vector<1x8x384xf32>
    tpu.vector_store %arg3[%c0_33, %c0_34, %c0_35], %32 {strides = array<i32>} : memref<1x8x384xf32, #tpu.memory_space<vmem>>, vector<1x8x384xf32>,
    return
  }
  func.func @transform_0(%arg0: i32) -> (i32, i32, i32) {
    %c0_i32 = arith.constant 0 : i32
    %c0_i32_0 = arith.constant 0 : i32
    %c0_i32_1 = arith.constant 0 : i32
    return %arg0, %c0_i32, %c0_i32_0 : i32, i32, i32
  }
  func.func @transform_1(%arg0: i32) -> (i32, i32) {
    %c0_i32 = arith.constant 0 : i32
    %c0_i32_0 = arith.constant 0 : i32
    %c0_i32_1 = arith.constant 0 : i32
    return %c0_i32, %c0_i32_0 : i32, i32
  }
  func.func @transform_2(%arg0: i32) -> (i32, i32, i32) {
    %c0_i32 = arith.constant 0 : i32
    %c0_i32_0 = arith.constant 0 : i32
    %c0_i32_1 = arith.constant 0 : i32
    return %arg0, %c0_i32, %c0_i32_0 : i32, i32, i32
  }
}

</mosaic_0001>

<llo_original>
// kernel: tpu_custom_call.1
$region0: #{tpu_custom_call.1}
  #allocation0 [shape = 'u32[]', space=smem, size = 0x4, offset = 0x4, fixed_abs, tag = 'smem constant byte address 0x4 - core index']
  #allocation1 [shape = 'u32[144,128]{1,0:T(1,128)}', space=vmem, size = 0x12000, scoped, tag = 'internal scratch']
  #allocation2 [shape = 'f32[36,384]{1,0:T(8,128)}', space=vmem, size = 0xf000, scoped, tag = 'scratch operand']
  %s0 = inlined_call_operand.hbm [shape: f32[2,4,512], index: 0, kind: input, shape index: {}]
  %s1 = inlined_call_operand.hbm [shape: f32[8,36], index: 1, kind: input, shape index: {}]
  %s2 = inlined_call_operand.hbm [shape: f32[2,8,384], index: 2, kind: output, shape index: {}]
  %s3 = sld [smem:[#allocation0]]
  $region49: #{tpu_custom_call.1} parent=0
    _
  %s5 = ssub.s32 1, %s3
  %s6 = scalar_select 0, %s5, %s3
  $region1: #{tpu_custom_call.1} parent=0
    #allocation3 [shape = 'u8[16384]{0}', space=vmem, size = 0x4000, scoped, tag = 'input window, operand 0']
    #allocation4 [shape = 's32[2]{0}', space=sflag, size = 0x8, scoped, tag = 'scoped memory for tpu_custom_call.1']
    #allocation5 [shape = 's32[2]{0}', space=sflag, size = 0x8, scoped, tag = 'scoped memory for tpu_custom_call.1']
    #allocation6 [shape = 'u8[4096]{0}', space=vmem, size = 0x1000, scoped, tag = 'input window, operand 1, single buffered']
    #allocation7 [shape = 's32[1]{0}', space=sflag, size = 0x4, scoped, tag = 'scoped memory for tpu_custom_call.1']
    #allocation8 [shape = 'u8[24576]{0}', space=vmem, size = 0x6000, scoped, tag = 'output window, operand 0']
    %7 = vsyncpa [#allocation4], 0
    %s8 = scalar_lea.sflag [#allocation4], 1
    %9 = vsyncpa %s8, 0
    %10 = vsyncpa [#allocation7], 0
    %11 = vsyncpa [#allocation5], 0
    %s12 = scalar_lea.sflag [#allocation5], 1
    %13 = vsyncpa %s12, 0
    loop: start=0, step=1, limit=4
    $region2: #{tpu_custom_call.1} parent=1 // loop_pre_header
      _
    $region3: #{tpu_custom_call.1} parent=1 // loop_header
      %s15 = sphi 0, %s19
      %p16 = scmp.ge.s32.totalorder %s15, 4
      %s25 = sphi 0, %s27
      %s28 = sphi 0, %s25
      %s29 = sphi 0, %s28
      %s45 = sphi 0, %s29
      %s49 = sphi 0, %s49
      %s51 = sphi 0, %s49
      %s52 = sphi 0, %s51
      %s66 = sphi 0, %s52
      %s72 = sphi 0, %s74
      %s75 = sphi 0, %s72
      %s76 = sphi 0, %s75
      %s92 = sphi 0, %s76
    $region4: #{tpu_custom_call.1} parent=1 // loop_header_branch
      %18 = sbr.rel (%p16) target = $region8
    $region5: #{tpu_custom_call.1} parent=1 // loop_body
      %s20 = ssub.s32 %s15, 1
      %s21 = ssub.s32 %s15, 2
      %s22 = sadd.s32 %s15, 1
      %s23 = ssub.s32 %s15, %s22
      %p24 = scmp.eq.s32.totalorder %s23, 0
      %s26 = sadd.s32 %s25, 1
      %s27 = scalar_select %p24, %s25, %s26
      %p30 = pneg %p24
      %p31 = scmp.eq.s32.totalorder %s15, 1
      %p32 = por %p30, %p31
      %p33 = scmp.ne.s32.totalorder %s25, %s28
      %p34 = scmp.eq.s32.totalorder %s15, 0
      %p35 = por %p33, %p34
      %p36 = scmp.ne.s32.totalorder %s25, %s28
      %p37 = scmp.eq.s32.totalorder %s20, 1
      %p38 = por %p36, %p37
      %p39 = scmp.ne.s32.totalorder %s28, %s29
      %p40 = scmp.eq.s32.totalorder %s20, 0
      %p41 = por %p39, %p40
      %p42 = scmp.ne.s32.totalorder %s28, %s29
      %p43 = scmp.eq.s32.totalorder %s21, 1
      %p44 = por %p42, %p43
      %p46 = scmp.ne.s32.totalorder %s29, %s45
      %p47 = scmp.eq.s32.totalorder %s21, 0
      %p48 = por %p46, %p47
      %s50 = sadd.s32 %s49, 1
      %p53 = scmp.eq.s32.totalorder %s15, 1
      %p54 = scmp.ne.s32.totalorder %s49, %s51
      %p55 = scmp.eq.s32.totalorder %s15, 0
      %p56 = por %p54, %p55
      %p57 = scmp.ne.s32.totalorder %s49, %s51
      %p58 = scmp.eq.s32.totalorder %s20, 1
      %p59 = por %p57, %p58
      %p60 = scmp.ne.s32.totalorder %s51, %s52
      %p61 = scmp.eq.s32.totalorder %s20, 0
      %p62 = por %p60, %p61
      %p63 = scmp.ne.s32.totalorder %s51, %s52
      %p64 = scmp.eq.s32.totalorder %s21, 1
      %p65 = por %p63, %p64
      %p67 = scmp.ne.s32.totalorder %s52, %s66
      %p68 = scmp.eq.s32.totalorder %s21, 0
      %p69 = por %p67, %p68
      %s70 = ssub.s32 %s15, %s22
      %p71 = scmp.eq.s32.totalorder %s70, 0
      %s73 = sadd.s32 %s72, 1
      %s74 = scalar_select %p71, %s72, %s73
      %p77 = pneg %p71
      %p78 = scmp.eq.s32.totalorder %s15, 1
      %p79 = por %p77, %p78
      %p80 = scmp.ne.s32.totalorder %s72, %s75
      %p81 = scmp.eq.s32.totalorder %s15, 0
      %p82 = por %p80, %p81
      %p83 = scmp.ne.s32.totalorder %s72, %s75
      %p84 = scmp.eq.s32.totalorder %s20, 1
      %p85 = por %p83, %p84
      %p86 = scmp.ne.s32.totalorder %s75, %s76
      %p87 = scmp.eq.s32.totalorder %s20, 0
      %p88 = por %p86, %p87
      %p89 = scmp.ne.s32.totalorder %s75, %s76
      %p90 = scmp.eq.s32.totalorder %s21, 1
      %p91 = por %p89, %p90
      %p93 = scmp.ne.s32.totalorder %s76, %s92
      %p94 = scmp.eq.s32.totalorder %s21, 0
      %p95 = por %p93, %p94
      %p96 = scmp.le.s32.totalorder 1, %s15
      %p97 = scmp.lt.s32.totalorder %s15, 3
      %p98 = pnand %p96, %p97
      %p99 = pneg %p98
      // Predicated region
      $region9: #{tpu_custom_call.1} parent=5 // pred_check
        _
      $region10: #{tpu_custom_call.1} parent=5 // pred_check_branch
        %101 = sbr.rel (%p98) target = $region12
      $region11: #{tpu_custom_call.1} parent=5 // pred_region
        %s102 = ssub.s32 %s15, 1
        // Predicated region
        $region13: #{tpu_custom_call.1} parent=11 // pred_check
          %p103 = pneg %p62
        $region14: #{tpu_custom_call.1} parent=11 // pred_check_branch
          %105 = sbr.rel (%p103) target = $region16
        $region15: #{tpu_custom_call.1} parent=11 // pred_region
          %s107 = ssub.s32 128, 128
          %108 = vsyncadd [#allocation7], %s107
          %s110 = sshll.u32 [#allocation6], 4
          %s111 = int_to_ptr.vmem [resolvable:$true] %s110
          %113 = dma.hbm_to_vmem [thread:$0]  %s1, 128, %s111, [#allocation7]
        $region16: #{tpu_custom_call.1} parent=11 // pred_fallthru
          _
      $region12: #{tpu_custom_call.1} parent=5 // pred_fallthru
        _
      %p114 = scmp.lt.s32.totalorder %s15, 2
      // Predicated region
      $region17: #{tpu_custom_call.1} parent=5 // pred_check
        %p115 = pneg %p114
      $region18: #{tpu_custom_call.1} parent=5 // pred_check_branch
        %117 = sbr.rel (%p115) target = $region20
      $region19: #{tpu_custom_call.1} parent=5 // pred_region
        // Predicated region
        $region21: #{tpu_custom_call.1} parent=19 // pred_check
          %p118 = pneg %p35
        $region22: #{tpu_custom_call.1} parent=19 // pred_check_branch
          %120 = sbr.rel (%p118) target = $region24
        $region23: #{tpu_custom_call.1} parent=19 // pred_region
          %s121 = sand.u32 %s25, 1
          %s122 = scalar_lea.sflag [#allocation4], %s121
          %s123 = sand.u32 %s25, 1
          %s124 = smul.addr %s123, 16
          %s125 = scalar_lea.vmem [#allocation3], %s124
          %s127 = ssub.s32 256, 256
          %128 = vsyncadd %s122, %s127
          %s129 = smul.addr %s15, 4
          %s130 = smul.addr %s129, 64
          %s131 = scalar_lea.hbm %s0, %s130
          %s133 = sshll.u32 %s125, 4
          %s134 = int_to_ptr.vmem [resolvable:$true] %s133
          %136 = dma.hbm_to_vmem [thread:$0]  %s131, 256, %s134, %s122
        $region24: #{tpu_custom_call.1} parent=19 // pred_fallthru
          _
      $region20: #{tpu_custom_call.1} parent=5 // pred_fallthru
        _
      %p137 = scmp.le.s32.totalorder 1, %s15
      %p138 = scmp.lt.s32.totalorder %s15, 3
      %p139 = pnand %p137, %p138
      %p140 = pneg %p139
      // Predicated region
      $region25: #{tpu_custom_call.1} parent=5 // pred_check
        _
      $region26: #{tpu_custom_call.1} parent=5 // pred_check_branch
        %142 = sbr.rel (%p139) target = $region28
      $region27: #{tpu_custom_call.1} parent=5 // pred_region
        %s143 = ssub.s32 %s15, 1
        %s144 = sand.u32 %s28, 1
        %s145 = scalar_lea.sflag [#allocation4], %s144
        %s146 = sand.u32 %s28, 1
        %s147 = smul.addr %s146, 16
        %s148 = scalar_lea.vmem [#allocation3], %s147
        // Predicated region
        $region29: #{tpu_custom_call.1} parent=27 // pred_check
          %p149 = pneg %p41
        $region30: #{tpu_custom_call.1} parent=27 // pred_check_branch
          %151 = sbr.rel (%p149) target = $region32
        $region31: #{tpu_custom_call.1} parent=27 // pred_region
          %152 = dma.done %s145, 256
        $region32: #{tpu_custom_call.1} parent=27 // pred_fallthru
          _
        // Predicated region
        $region33: #{tpu_custom_call.1} parent=27 // pred_check
          %p153 = pneg %p62
        $region34: #{tpu_custom_call.1} parent=27 // pred_check_branch
          %155 = sbr.rel (%p153) target = $region36
        $region35: #{tpu_custom_call.1} parent=27 // pred_region
          %156 = dma.done [#allocation7], 128
        $region36: #{tpu_custom_call.1} parent=27 // pred_fallthru
          _
        %s157 = sand.u32 %s28, 1
        %s158 = scalar_lea.sflag [#allocation4], %s157
        %s159 = sand.u32 %s28, 1
        %s160 = smul.addr %s159, 16
        %s161 = scalar_lea.vmem [#allocation3], %s160
        %p162 = pneg %p41
        %p163 = pneg %p38
        %p164 = pneg %p62
        %p165 = pneg %p59
        %p166 = pneg %p88
        %p167 = pneg %p85
        %s168 = sand.u32 %s75, 1
        %s169 = scalar_lea.sflag [#allocation5], %s168
        %s170 = sand.u32 %s75, 1
        %s171 = smul.addr %s170, 24
        %s172 = scalar_lea.vmem [#allocation8], %s171
        %v173 = vld [vmem:[%s148] sm:$0xff]
        %v174 = vld [vmem:[%s148 + $0x8] sm:$0xf]
        %v176 = vcombine.high %v173, %v173
        %178 = vst [vmem:[#allocation2] sm:$0xf] %v173
        %179 = vst [vmem:[#allocation2 + $0x8] sm:$0xf] %v176
        %180 = vst [vmem:[#allocation2 + $0x10] sm:$0xf] %v174
        %v181 = vld [vmem:[%s148] sm:$0xff]
        %v182 = vld [vmem:[%s148 + $0x8] sm:$0xff]
        %v185 = vcombine.low %v181, %v181
        %v186 = vcombine.low %v182, %v182
        %187 = vrot.lane.b32.xlu0 %v185, 127
        %v188 = vpop.permute.xlu0 %187
        %189 = vrot.lane.b32.xlu0 %v181, 127
        %v190 = vpop.permute.xlu0 %189
        %191 = vrot.lane.b32.xlu0 %v186, 127
        %v192 = vpop.permute.xlu0 %191
        %193 = vrot.lane.b32.xlu0 %v182, 127
        %v194 = vpop.permute.xlu0 %193
        %vm195 = vcmask 1039360
        %v196 = vsel %vm195, %v188, %v190
        %v197 = vsel %vm195, %v190, %v192
        %v198 = vsel %vm195, %v192, %v194
        %202 = vst [vmem:[#allocation2] sm:$0xf0] %v196
        %203 = vst [vmem:[#allocation2 + $0x8] sm:$0xf0] %v197
        %204 = vst [vmem:[#allocation2 + $0x10] sm:$0xf0] %v198
        %v205 = vld [vmem:[%s148] sm:$0xff]
        %v206 = vld [vmem:[%s148 + $0x8] sm:$0xff]
        %v209 = vcombine.high %v205, %v205
        %v210 = vcombine.high %v206, %v206
        %211 = vrot.lane.b32.xlu0 %v205, 126
        %v212 = vpop.permute.xlu0 %211
        %213 = vrot.lane.b32.xlu0 %v209, 126
        %v214 = vpop.permute.xlu0 %213
        %215 = vrot.lane.b32.xlu0 %v206, 126
        %v216 = vpop.permute.xlu0 %215
        %217 = vrot.lane.b32.xlu0 %v210, 126
        %v218 = vpop.permute.xlu0 %217
        %vm219 = vcmask 1031168
        %v220 = vsel %vm219, %v212, %v214
        %v221 = vsel %vm219, %v214, %v216
        %v222 = vsel %vm219, %v216, %v218
        %226 = vst [vmem:[#allocation2 + $0x18] sm:$0xf] %v220
        %227 = vst [vmem:[#allocation2 + $0x20] sm:$0xf] %v221
        %228 = vst [vmem:[#allocation2 + $0x28] sm:$0xf] %v222
        %v229 = vld [vmem:[%s148] sm:$0xff]
        %v230 = vld [vmem:[%s148 + $0x8] sm:$0xff]
        %v233 = vcombine.low %v229, %v229
        %v234 = vcombine.low %v230, %v230
        %235 = vrot.lane.b32.xlu0 %v233, 110
        %v236 = vpop.permute.xlu0 %235
        %237 = vrot.lane.b32.xlu0 %v229, 110
        %v238 = vpop.permute.xlu0 %237
        %239 = vrot.lane.b32.xlu0 %v234, 110
        %v240 = vpop.permute.xlu0 %239
        %241 = vrot.lane.b32.xlu0 %v230, 110
        %v242 = vpop.permute.xlu0 %241
        %vm243 = vcmask 900096
        %v244 = vsel %vm243, %v236, %v238
        %v245 = vsel %vm243, %v238, %v240
        %v246 = vsel %vm243, %v240, %v242
        %250 = vst [vmem:[#allocation2 + $0x18] sm:$0xf0] %v244
        %251 = vst [vmem:[#allocation2 + $0x20] sm:$0xf0] %v245
        %252 = vst [vmem:[#allocation2 + $0x28] sm:$0xf0] %v246
        %v253 = vld [vmem:[%s148] sm:$0xff]
        %v254 = vld [vmem:[%s148 + $0x8] sm:$0xff]
        %v257 = vcombine.high %v253, %v253
        %v258 = vcombine.high %v254, %v254
        %259 = vrot.lane.b32.xlu0 %v253, 109
        %v260 = vpop.permute.xlu0 %259
        %261 = vrot.lane.b32.xlu0 %v257, 109
        %v262 = vpop.permute.xlu0 %261
        %263 = vrot.lane.b32.xlu0 %v254, 109
        %v264 = vpop.permute.xlu0 %263
        %265 = vrot.lane.b32.xlu0 %v258, 109
        %v266 = vpop.permute.xlu0 %265
        %vm267 = vcmask 891904
        %v268 = vsel %vm267, %v260, %v262
        %v269 = vsel %vm267, %v262, %v264
        %v270 = vsel %vm267, %v264, %v266
        %274 = vst [vmem:[#allocation2 + $0x30] sm:$0xf] %v268
        %275 = vst [vmem:[#allocation2 + $0x38] sm:$0xf] %v269
        %276 = vst [vmem:[#allocation2 + $0x40] sm:$0xf] %v270
        %v277 = vld [vmem:[%s148] sm:$0xff]
        %v278 = vld [vmem:[%s148 + $0x8] sm:$0xff]
        %v281 = vcombine.low %v277, %v277
        %v282 = vcombine.low %v278, %v278
        %283 = vrot.lane.b32.xlu0 %v281, 108
        %v284 = vpop.permute.xlu0 %283
        %285 = vrot.lane.b32.xlu0 %v277, 108
        %v286 = vpop.permute.xlu0 %285
        %287 = vrot.lane.b32.xlu0 %v282, 108
        %v288 = vpop.permute.xlu0 %287
        %289 = vrot.lane.b32.xlu0 %v278, 108
        %v290 = vpop.permute.xlu0 %289
        %vm291 = vcmask 883712
        %v292 = vsel %vm291, %v284, %v286
        %v293 = vsel %vm291, %v286, %v288
        %v294 = vsel %vm291, %v288, %v290
        %298 = vst [vmem:[#allocation2 + $0x30] sm:$0xf0] %v292
        %299 = vst [vmem:[#allocation2 + $0x38] sm:$0xf0] %v293
        %300 = vst [vmem:[#allocation2 + $0x40] sm:$0xf0] %v294
        %v301 = vld [vmem:[%s148] sm:$0xff]
        %v302 = vld [vmem:[%s148 + $0x8] sm:$0xff]
        %v305 = vcombine.high %v301, %v301
        %v306 = vcombine.high %v302, %v302
        %307 = vrot.lane.b32.xlu0 %v301, 92
        %v308 = vpop.permute.xlu0 %307
        %309 = vrot.lane.b32.xlu0 %v305, 92
        %v310 = vpop.permute.xlu0 %309
        %311 = vrot.lane.b32.xlu0 %v302, 92
        %v312 = vpop.permute.xlu0 %311
        %313 = vrot.lane.b32.xlu0 %v306, 92
        %v314 = vpop.permute.xlu0 %313
        %vm315 = vcmask 752640
        %v316 = vsel %vm315, %v308, %v310
        %v317 = vsel %vm315, %v310, %v312
        %v318 = vsel %vm315, %v312, %v314
        %322 = vst [vmem:[#allocation2 + $0x48] sm:$0xf] %v316
        %323 = vst [vmem:[#allocation2 + $0x50] sm:$0xf] %v317
        %324 = vst [vmem:[#allocation2 + $0x58] sm:$0xf] %v318
        %v325 = vld [vmem:[%s148] sm:$0xff]
        %v326 = vld [vmem:[%s148 + $0x8] sm:$0xff]
        %v329 = vcombine.low %v325, %v325
        %v330 = vcombine.low %v326, %v326
        %331 = vrot.lane.b32.xlu0 %v329, 91
        %v332 = vpop.permute.xlu0 %331
        %333 = vrot.lane.b32.xlu0 %v325, 91
        %v334 = vpop.permute.xlu0 %333
        %335 = vrot.lane.b32.xlu0 %v330, 91
        %v336 = vpop.permute.xlu0 %335
        %337 = vrot.lane.b32.xlu0 %v326, 91
        %v338 = vpop.permute.xlu0 %337
        %vm339 = vcmask 744448
        %v340 = vsel %vm339, %v332, %v334
        %v341 = vsel %vm339, %v334, %v336
        %v342 = vsel %vm339, %v336, %v338
        %346 = vst [vmem:[#allocation2 + $0x48] sm:$0xf0] %v340
        %347 = vst [vmem:[#allocation2 + $0x50] sm:$0xf0] %v341
        %348 = vst [vmem:[#allocation2 + $0x58] sm:$0xf0] %v342
        %v349 = vld [vmem:[%s148] sm:$0xff]
        %v350 = vld [vmem:[%s148 + $0x8] sm:$0xff]
        %v353 = vcombine.high %v349, %v349
        %v354 = vcombine.high %v350, %v350
        %355 = vrot.lane.b32.xlu0 %v349, 90
        %v356 = vpop.permute.xlu0 %355
        %357 = vrot.lane.b32.xlu0 %v353, 90
        %v358 = vpop.permute.xlu0 %357
        %359 = vrot.lane.b32.xlu0 %v350, 90
        %v360 = vpop.permute.xlu0 %359
        %361 = vrot.lane.b32.xlu0 %v354, 90
        %v362 = vpop.permute.xlu0 %361
        %vm363 = vcmask 736256
        %v364 = vsel %vm363, %v356, %v358
        %v365 = vsel %vm363, %v358, %v360
        %v366 = vsel %vm363, %v360, %v362
        %370 = vst [vmem:[#allocation2 + $0x60] sm:$0xf] %v364
        %371 = vst [vmem:[#allocation2 + $0x68] sm:$0xf] %v365
        %372 = vst [vmem:[#allocation2 + $0x70] sm:$0xf] %v366
        %v373 = vld [vmem:[#allocation6] sm:$0xff]
        %v374 = vld [vmem:[#allocation2] sm:$0xff]
        %v375 = vld [vmem:[#allocation2 + $0x8] sm:$0xff]
        %v376 = vld [vmem:[#allocation2 + $0x10] sm:$0xff]
        %v377 = vld [vmem:[#allocation2 + $0x18] sm:$0xff]
        %v378 = vld [vmem:[#allocation2 + $0x20] sm:$0xff]
        %v379 = vld [vmem:[#allocation2 + $0x28] sm:$0xff]
        %v380 = vld [vmem:[#allocation2 + $0x30] sm:$0xff]
        %v381 = vld [vmem:[#allocation2 + $0x38] sm:$0xff]
        %v382 = vld [vmem:[#allocation2 + $0x40] sm:$0xff]
        %v383 = vld [vmem:[#allocation2 + $0x48] sm:$0xff]
        %v384 = vld [vmem:[#allocation2 + $0x50] sm:$0xff]
        %v385 = vld [vmem:[#allocation2 + $0x58] sm:$0xff]
        %v386 = vld [vmem:[#allocation2 + $0x60] sm:$0xf]
        %v387 = vld [vmem:[#allocation2 + $0x68] sm:$0xf]
        %v388 = vld [vmem:[#allocation2 + $0x70] sm:$0xf]
        %vm389 = vcmask 293888
        %v391 = vsel %vm389, %v373, 0
        %vm393 = vcmask 1043456
        %v395 = vsel %vm393, %v386, 0
        %v398 = vsel %vm393, %v387, 0
        %v401 = vsel %vm393, %v388, 0
        %403 = vmatprep.subr.mxu0 %v375
        %404 = vmatpush1.msra.mxu0 %v374
        %405 = vmatprep.subr.mxu0 %v378
        %406 = vmatpush1.msra.mxu0 %v377
        %407 = vmatprep.subr.mxu0 %v381
        %408 = vmatpush1.msra.mxu0 %v380
        %409 = vmatprep.subr.mxu0 %v384
        %410 = vmatpush1.msra.mxu0 %v383
        %411 = vmatprep.subr.mxu0 %v398
        %412 = vmatpush1.msra.mxu0 %v395
        %413 = vmatprep.subr.mxu0 0.0
        %414 = vmatpush1.msra.mxu0 0.0
        %415 = vmatprep.subr.mxu0 0.0
        %416 = vmatpush1.msra.mxu0 0.0
        %417 = vmatprep.subr.mxu0 0.0
        %418 = vmatpush1.msra.mxu0 0.0
        %419 = vmatprep.subr.mxu0 0.0
        %420 = vmatpush1.msra.mxu0 0.0
        %421 = vmatprep.subr.mxu0 0.0
        %422 = vmatpush1.msra.mxu0 0.0
        %423 = vmatprep.subr.mxu0 0.0
        %424 = vmatpush1.msra.mxu0 0.0
        %425 = vmatprep.subr.mxu0 0.0
        %426 = vmatpush1.msra.mxu0 0.0
        %427 = vmatprep.subr.mxu0 0.0
        %428 = vmatpush1.msra.mxu0 0.0
        %429 = vmatprep.subr.mxu0 0.0
        %430 = vmatpush1.msra.mxu0 0.0
        %431 = vmatprep.subr.mxu0 0.0
        %432 = vmatpush1.msra.mxu0 0.0
        %433 = vmatprep.subr.mxu0 0.0
        %434 = vmatpush1.msra.mxu0 0.0
        %435 = vmatprep.subr.mxu0 0.0
        %436 = vmatpush1.msra.mxu0 0.0
        %437 = vmatprep.subr.mxu0 0.0
        %438 = vmatpush1.msra.mxu0 0.0
        %439 = vmatprep.subr.mxu0 0.0
        %440 = vmatpush1.msra.mxu0 0.0
        %441 = vmatprep.subr.mxu0 0.0
        %442 = vmatpush1.msra.mxu0 0.0
        %443 = vmatprep.subr.mxu0 0.0
        %444 = vmatpush1.msra.mxu0 0.0
        %445 = vmatprep.subr.mxu0 0.0
        %446 = vmatpush1.msra.mxu0 0.0
        %447 = vmatprep.subr.mxu0 0.0
        %448 = vmatpush1.msra.mxu0 0.0
        %449 = vmatprep.subr.mxu0 0.0
        %450 = vmatpush1.msra.mxu0 0.0
        %451 = vmatprep.subr.mxu0 0.0
        %452 = vmatpush1.msra.mxu0 0.0
        %453 = vmatprep.subr.mxu0 0.0
        %454 = vmatpush1.msra.mxu0 0.0
        %455 = vmatprep.subr.mxu0 0.0
        %456 = vmatpush1.msra.mxu0 0.0
        %457 = vmatprep.subr.mxu0 0.0
        %458 = vmatpush1.msra.mxu0 0.0
        %459 = vmatprep.subr.mxu0 0.0
        %460 = vmatpush1.msra.mxu0 0.0
        %461 = vmatprep.subr.mxu0 0.0
        %462 = vmatpush1.msra.mxu0 0.0
        %463 = vmatprep.subr.mxu0 0.0
        %464 = vmatpush1.msra.mxu0 0.0
        %465 = vmatprep.subr.mxu0 0.0
        %466 = vmatpush1.msra.mxu0 0.0
        %467 = vmatprep.mubr.f32.mxu0 0.0
        %468 = vmatmul.mubr.f32.gmra.mrb[0].mxu0 %v391
        %v469 = vpop.f32.mrb[0].mxu0
        %v470 = vadd.f32 0.0, %v469
        %v471 = vpop.f32.mrb[0].mxu0
        %v472 = vadd.f32 0.0, %v471
        %473 = vdwg.mxu0
        %474 = vmatprep.subr.mxu0 0.0
        %475 = vmatpush1.msra.mxu0 %v376
        %476 = vmatprep.subr.mxu0 0.0
        %477 = vmatpush1.msra.mxu0 %v379
        %478 = vmatprep.subr.mxu0 0.0
        %479 = vmatpush1.msra.mxu0 %v382
        %480 = vmatprep.subr.mxu0 0.0
        %481 = vmatpush1.msra.mxu0 %v385
        %482 = vmatprep.subr.mxu0 0.0
        %483 = vmatpush1.msra.mxu0 %v401
        %484 = vmatprep.subr.mxu0 0.0
        %485 = vmatpush1.msra.mxu0 0.0
        %486 = vmatprep.subr.mxu0 0.0
        %487 = vmatpush1.msra.mxu0 0.0
        %488 = vmatprep.subr.mxu0 0.0
        %489 = vmatpush1.msra.mxu0 0.0
        %490 = vmatprep.subr.mxu0 0.0
        %491 = vmatpush1.msra.mxu0 0.0
        %492 = vmatprep.subr.mxu0 0.0
        %493 = vmatpush1.msra.mxu0 0.0
        %494 = vmatprep.subr.mxu0 0.0
        %495 = vmatpush1.msra.mxu0 0.0
        %496 = vmatprep.subr.mxu0 0.0
        %497 = vmatpush1.msra.mxu0 0.0
        %498 = vmatprep.subr.mxu0 0.0
        %499 = vmatpush1.msra.mxu0 0.0
        %500 = vmatprep.subr.mxu0 0.0
        %501 = vmatpush1.msra.mxu0 0.0
        %502 = vmatprep.subr.mxu0 0.0
        %503 = vmatpush1.msra.mxu0 0.0
        %504 = vmatprep.subr.mxu0 0.0
        %505 = vmatpush1.msra.mxu0 0.0
        %506 = vmatprep.subr.mxu0 0.0
        %507 = vmatpush1.msra.mxu0 0.0
        %508 = vmatprep.subr.mxu0 0.0
        %509 = vmatpush1.msra.mxu0 0.0
        %510 = vmatprep.subr.mxu0 0.0
        %511 = vmatpush1.msra.mxu0 0.0
        %512 = vmatprep.subr.mxu0 0.0
        %513 = vmatpush1.msra.mxu0 0.0
        %514 = vmatprep.subr.mxu0 0.0
        %515 = vmatpush1.msra.mxu0 0.0
        %516 = vmatprep.subr.mxu0 0.0
        %517 = vmatpush1.msra.mxu0 0.0
        %518 = vmatprep.subr.mxu0 0.0
        %519 = vmatpush1.msra.mxu0 0.0
        %520 = vmatprep.subr.mxu0 0.0
        %521 = vmatpush1.msra.mxu0 0.0
        %522 = vmatprep.subr.mxu0 0.0
        %523 = vmatpush1.msra.mxu0 0.0
        %524 = vmatprep.subr.mxu0 0.0
        %525 = vmatpush1.msra.mxu0 0.0
        %526 = vmatprep.subr.mxu0 0.0
        %527 = vmatpush1.msra.mxu0 0.0
        %528 = vmatprep.subr.mxu0 0.0
        %529 = vmatpush1.msra.mxu0 0.0
        %530 = vmatprep.subr.mxu0 0.0
        %531 = vmatpush1.msra.mxu0 0.0
        %532 = vmatprep.subr.mxu0 0.0
        %533 = vmatpush1.msra.mxu0 0.0
        %534 = vmatprep.subr.mxu0 0.0
        %535 = vmatpush1.msra.mxu0 0.0
        %536 = vmatprep.subr.mxu0 0.0
        %537 = vmatpush1.msra.mxu0 0.0
        %538 = vmatprep.mubr.f32.mxu0 0.0
        %539 = vmatmul.mubr.f32.gmra.mrb[0].mxu0 %v391
        %v540 = vpop.f32.mrb[0].mxu0
        %v541 = vadd.f32 0.0, %v540
        %v542 = vpop.f32.mrb[0].mxu0
        %543 = vdwg.mxu0
        %544 = vst [vmem:[%s172] sm:$0xff] %v470
        %545 = vst [vmem:[%s172 + $0x8] sm:$0xff] %v472
        %546 = vst [vmem:[%s172 + $0x10] sm:$0xff] %v541
        %s547 = sand.u32 %s75, 1
        %s548 = scalar_lea.sflag [#allocation5], %s547
        %s549 = sand.u32 %s75, 1
        %s550 = smul.addr %s549, 24
        %s551 = scalar_lea.vmem [#allocation8], %s550
        // Predicated region
        $region37: #{tpu_custom_call.1} parent=27 // pred_check
          %p552 = pneg %p85
        $region38: #{tpu_custom_call.1} parent=27 // pred_check_branch
          %554 = sbr.rel (%p552) target = $region40
        $region39: #{tpu_custom_call.1} parent=27 // pred_region
          %s556 = ssub.s32 384, 384
          %557 = vsyncadd %s548, %s556
          %s558 = smul.addr %s20, 3
          %s559 = smul.addr %s558, 128
          %s560 = scalar_lea.hbm %s2, %s559
          %s562 = sshll.u32 %s551, 4
          %s563 = int_to_ptr.vmem [resolvable:$true] %s562
          %565 = dma.vmem_to_hbm [thread:$0]  %s563, 384, %s560, %s548
        $region40: #{tpu_custom_call.1} parent=27 // pred_fallthru
          _
      $region28: #{tpu_custom_call.1} parent=5 // pred_fallthru
        _
      %p566 = scmp.le.s32.totalorder 2, %s15
      // Predicated region
      $region41: #{tpu_custom_call.1} parent=5 // pred_check
        %p567 = pneg %p566
      $region42: #{tpu_custom_call.1} parent=5 // pred_check_branch
        %569 = sbr.rel (%p567) target = $region44
      $region43: #{tpu_custom_call.1} parent=5 // pred_region
        %s570 = ssub.s32 %s15, 2
        // Predicated region
        $region45: #{tpu_custom_call.1} parent=43 // pred_check
          %p571 = pneg %p91
        $region46: #{tpu_custom_call.1} parent=43 // pred_check_branch
          %573 = sbr.rel (%p571) target = $region48
        $region47: #{tpu_custom_call.1} parent=43 // pred_region
          %s574 = sand.u32 %s76, 1
          %s575 = scalar_lea.sflag [#allocation5], %s574
          %s576 = sand.u32 %s76, 1
          %s577 = smul.addr %s576, 24
          %s578 = scalar_lea.vmem [#allocation8], %s577
          %579 = dma.done %s575, 384
        $region48: #{tpu_custom_call.1} parent=43 // pred_fallthru
          _
      $region44: #{tpu_custom_call.1} parent=5 // pred_fallthru
        _
    $region6: #{tpu_custom_call.1} parent=1 // loop_footer
      %s19 = sadd.s32 1, %s15
    $region7: #{tpu_custom_call.1} parent=1 // loop_footer_branch
      %14 = sbr.rel target = $region3
    $region8: #{tpu_custom_call.1} parent=1 // loop_exit
      _
    %580 = vsyncpa [#allocation4], 1
    %s581 = scalar_lea.sflag [#allocation4], 1
    %582 = vsyncpa %s581, 1
    %583 = vsyncpa [#allocation7], 1
    %584 = vsyncpa [#allocation5], 1
    %s585 = scalar_lea.sflag [#allocation5], 1
    %586 = vsyncpa %s585, 1

</llo_original>
